<compile_context>
chip_gen: v5e
topology: v5e:2x2
jax: 0.10.0
libtpu: 0.0.40
codegen_flags: <defaults>
</compile_context>

<pallas_src>
from functools import partial

import jax
import jax.numpy as jnp
from jax.experimental import pallas as pl
from jax.experimental.pallas import tpu as pltpu

COMPUTE_DTYPE = jnp.bfloat16


# --------------------- generation-dependent VMEM budget -----------------------

def _detect_vmem_bytes():
    try:
        info_fn = getattr(pltpu, "get_tpu_info", None)
        if info_fn is not None:
            return int(info_fn().vmem_capacity_bytes)
    except Exception:
        pass
    return 64 * 1024 * 1024  # conservative default (v7x-sized)


_PHYS_VMEM = _detect_vmem_bytes()
if _PHYS_VMEM >= 128 * 1024 * 1024:          # v5e / v6e: 128 MiB physical VMEM
    VMEM_LIMIT = 96 * 1024 * 1024
    CT_TN_CAP = 8192                          # 32 MiB bf16 weight blocks
    WEIGHT_BUF_BUDGET = 64 * 1024 * 1024
else:                                         # v7x: 64 MiB physical (or unknown)
    VMEM_LIMIT = 48 * 1024 * 1024
    CT_TN_CAP = 4096                          # 16 MiB bf16 weight blocks
    WEIGHT_BUF_BUDGET = 32 * 1024 * 1024


# --------------------------- tiling helpers -----------------------------------

def _pick_tile(dim, cap):
    """Largest clean divisor of `dim` that is <= cap (full dim if it fits).
    Fails loudly instead of silently returning an oversized block."""
    if dim <= cap:
        return dim
    t = cap
    while t >= 8 and dim % t:
        t //= 2
    if t < 8 or dim % t:
        raise ValueError(
            f"_pick_tile: no tile <= {cap} divides {dim}; pad the operand")
    return t


def _ct_tn_cap(n):
    """Lane-tile cap for the conv-transpose weight matmul: as large as the
    per-generation cap allows, but keep >= 4 N blocks when possible so v7x
    megacore still gets >= 2 blocks per TensorCore."""
    return max(min(CT_TN_CAP, n // 4), 512)


def _weight_spec(shape, index_map, buffers):
    """Weight BlockSpec, optionally with triple buffering (if supported)."""
    if buffers > 2:
        buffered = getattr(pl, "Buffered", None)
        if buffered is not None:
            try:
                return pl.BlockSpec(shape, index_map,
                                    pipeline_mode=buffered(buffers))
            except TypeError:
                pass
    return pl.BlockSpec(shape, index_map)


# --------------------------- Pallas kernels ----------------------------------

def _matmul_kernel(a_ref, b_ref, o_ref, acc_ref):
    """out = a @ b.  K reduction MUST be the innermost grid axis."""
    @pl.when(pl.program_id(2) == 0)
    def _():
        acc_ref[...] = jnp.zeros_like(acc_ref)

    acc_ref[...] += jnp.dot(a_ref[...], b_ref[...],
                            preferred_element_type=jnp.float32)

    @pl.when(pl.program_id(2) == pl.num_programs(2) - 1)
    def _():
        o_ref[...] = acc_ref[...].astype(o_ref.dtype)


def _matmul_bias_kernel(a_ref, b_ref, bias_ref, o_ref, acc_ref):
    """out = a @ b + bias.  K reduction MUST be the innermost grid axis."""
    @pl.when(pl.program_id(2) == 0)
    def _():
        acc_ref[...] = jnp.zeros_like(acc_ref)

    acc_ref[...] += jnp.dot(a_ref[...], b_ref[...],
                            preferred_element_type=jnp.float32)

    @pl.when(pl.program_id(2) == pl.num_programs(2) - 1)
    def _():
        o_ref[...] = (acc_ref[...] + bias_ref[...]).astype(o_ref.dtype)


def matmul_bias(a, b, bias=None, *, out_dtype=None,
                tm_cap=256, tn_cap=2048, tk_cap=2048):
    """out[M, N] = a[M, K] @ b[K, N] (+ bias[N], fused epilogue).

    NOTE: accumulator correctness relies on K being the last ("arbitrary")
    grid axis; do not reorder the grid when retuning tiles."""
    M, K = a.shape
    K2, N = b.shape
    assert K == K2
    if out_dtype is None:
        out_dtype = a.dtype
    tm = _pick_tile(M, tm_cap)
    tn = _pick_tile(N, tn_cap)
    tk = _pick_tile(K, tk_cap)
    assert M % tm == 0 and N % tn == 0 and K % tk == 0, (M, N, K, tm, tn, tk)

    grid = (M // tm, N // tn, K // tk)

    # Triple-buffer the weight stream when it fits the per-generation budget
    # and there are enough distinct weight blocks to keep in flight.
    n_wblocks = (K // tk) * (N // tn)
    wblock_bytes = tk * tn * b.dtype.itemsize
    wbuffers = 3 if (n_wblocks >= 3 and 3 * wblock_bytes <= WEIGHT_BUF_BUDGET) else 2

    a_spec = pl.BlockSpec((tm, tk), lambda i, j, k: (i, k))
    b_spec = _weight_spec((tk, tn), lambda i, j, k: (k, j), wbuffers)
    out_spec = pl.BlockSpec((tm, tn), lambda i, j, k: (i, j))

    if bias is None:
        kernel = _matmul_kernel
        in_specs = [a_spec, b_spec]
        operands = (a, b)
    else:
        kernel = _matmul_bias_kernel
        in_specs = [a_spec, b_spec,
                    pl.BlockSpec((1, tn), lambda i, j, k: (0, j))]
        operands = (a, b, bias.reshape(1, N).astype(jnp.float32))

    return pl.pallas_call(
        kernel,
        out_shape=jax.ShapeDtypeStruct((M, N), out_dtype),
        grid_spec=pltpu.PrefetchScalarGridSpec(
            num_scalar_prefetch=0,
            grid=grid,
            in_specs=in_specs,
            out_specs=out_spec,
            scratch_shapes=[pltpu.VMEM((tm, tn), jnp.float32)],
        ),
        compiler_params=pltpu.CompilerParams(
            dimension_semantics=("parallel", "parallel", "arbitrary"),
            vmem_limit_bytes=VMEM_LIMIT,
        ),
    )(*operands)


def _matmul_bn_relu_kernel(a_ref, b_ref, gamma_ref, beta_ref, o_ref, acc_ref):
    """1x1-conv matmul with training-mode BatchNorm + ReLU fused in the
    last-K epilogue (one-pass sum / sum-of-squares statistics).
    Grid = (Cout blocks [parallel], K blocks [arbitrary]); every block holds
    the full M rows so per-channel batch stats are exact.
    The conv bias is deliberately omitted: a per-channel constant is exactly
    cancelled by the train-mode BN mean subtraction."""
    k = pl.program_id(1)

    @pl.when(k == 0)
    def _():
        acc_ref[...] = jnp.zeros_like(acc_ref)

    acc_ref[...] += jnp.dot(a_ref[...], b_ref[...],
                            preferred_element_type=jnp.float32)

    @pl.when(k == pl.num_programs(1) - 1)
    def _():
        y = acc_ref[...]
        inv_m = 1.0 / y.shape[0]
        mean = jnp.sum(y, axis=0, keepdims=True) * inv_m
        msq = jnp.sum(y * y, axis=0, keepdims=True) * inv_m
        var = msq - mean * mean                       # biased, f32, M small
        scale = jax.lax.rsqrt(var + 1e-5) * gamma_ref[...]
        out = (y - mean) * scale + beta_ref[...]
        o_ref[...] = jnp.maximum(out, 0.0).astype(o_ref.dtype)


# ------------------ fallback BN (tiled, large-M safe) -------------------------

def _bn_stats_kernel(y_ref, s1_ref, s2_ref, s_acc, q_acc):
    """Per-channel sum and sum-of-squares, M reduction innermost."""
    i = pl.program_id(1)

    @pl.when(i == 0)
    def _():
        s_acc[...] = jnp.zeros_like(s_acc)
        q_acc[...] = jnp.zeros_like(q_acc)

    y = y_ref[...].astype(jnp.float32)
    s_acc[...] += jnp.sum(y, axis=0, keepdims=True)
    q_acc[...] += jnp.sum(y * y, axis=0, keepdims=True)

    @pl.when(i == pl.num_programs(1) - 1)
    def _():
        s1_ref[...] = s_acc[...]
        s2_ref[...] = q_acc[...]


def _scale_shift_relu_kernel(y_ref, scale_ref, shift_ref, o_ref):
    y = y_ref[...].astype(jnp.float32)
    o_ref[...] = jnp.maximum(y * scale_ref[...] + shift_ref[...],
                             0.0).astype(o_ref.dtype)


def bn_relu(y, gamma, beta):
    """Training-mode BatchNorm2d + ReLU over y[M, C] (fallback for large M).
    Two M-tiled Pallas passes: (1) per-channel sum / sum-of-squares,
    (2) normalize + ReLU."""
    # TODO(synk): running_mean/running_var buffer updates are not emitted.
    M, C = y.shape
    tc = _pick_tile(C, 512)
    tm = _pick_tile(M, 1024)

    s1, s2 = pl.pallas_call(
        _bn_stats_kernel,
        out_shape=(jax.ShapeDtypeStruct((1, C), jnp.float32),
                   jax.ShapeDtypeStruct((1, C), jnp.float32)),
        grid_spec=pltpu.PrefetchScalarGridSpec(
            num_scalar_prefetch=0,
            grid=(C // tc, M // tm),
            in_specs=[pl.BlockSpec((tm, tc), lambda j, i: (i, j))],
            out_specs=[pl.BlockSpec((1, tc), lambda j, i: (0, j)),
                       pl.BlockSpec((1, tc), lambda j, i: (0, j))],
            scratch_shapes=[pltpu.VMEM((1, tc), jnp.float32),
                            pltpu.VMEM((1, tc), jnp.float32)],
        ),
        compiler_params=pltpu.CompilerParams(
            dimension_semantics=("parallel", "arbitrary"),
            vmem_limit_bytes=VMEM_LIMIT,
        ),
    )(y)

    mean = s1 / M
    var = s2 / M - mean * mean
    scale = (jax.lax.rsqrt(var + 1e-5) * gamma.reshape(1, C)).astype(jnp.float32)
    shift = (beta.reshape(1, C) - mean * scale).astype(jnp.float32)

    return pl.pallas_call(
        _scale_shift_relu_kernel,
        out_shape=jax.ShapeDtypeStruct((M, C), y.dtype),
        grid_spec=pltpu.PrefetchScalarGridSpec(
            num_scalar_prefetch=0,
            grid=(M // tm, C // tc),
            in_specs=[pl.BlockSpec((tm, tc), lambda i, j: (i, j)),
                      pl.BlockSpec((1, tc), lambda i, j: (0, j)),
                      pl.BlockSpec((1, tc), lambda i, j: (0, j))],
            out_specs=pl.BlockSpec((tm, tc), lambda i, j: (i, j)),
        ),
        compiler_params=pltpu.CompilerParams(
            dimension_semantics=("parallel", "parallel"),
            vmem_limit_bytes=VMEM_LIMIT,
        ),
    )(y, scale, shift)


def conv1x1_bn_relu(x, w_mat, bias, gamma, beta, *, out_dtype=COMPUTE_DTYPE):
    """Conv2d(Cin, Cout, 1) + BatchNorm2d(train) + ReLU, fully fused.
    x: [N, H, W, Cin] (bf16), w_mat: [Cin, Cout] (bf16).
    `bias` is accepted for API parity with the PyTorch module but is not used:
    a per-channel constant bias is mathematically cancelled by the train-mode
    BN mean subtraction (dropping it is dead-work elimination, not a change
    in semantics)."""
    # TODO(synk): running_mean/running_var buffer updates are not emitted.
    del bias
    N, H, W, Cin = x.shape
    Cout = w_mat.shape[1]
    M = N * H * W
    a = x.reshape(M, Cin)
    if M > 4096:
        # Large-M fallback: tiled matmul then tiled two-pass BN.
        y = matmul_bias(a, w_mat, None, out_dtype=jnp.float32)
        return bn_relu(y, gamma, beta).astype(out_dtype).reshape(N, H, W, Cout)

    tn = _pick_tile(Cout, 256)   # >=2 parallel channel blocks for v7x megacore
    tk = _pick_tile(Cin, 1024)
    grid = (Cout // tn, Cin // tk)
    y = pl.pallas_call(
        _matmul_bn_relu_kernel,
        out_shape=jax.ShapeDtypeStruct((M, Cout), out_dtype),
        grid_spec=pltpu.PrefetchScalarGridSpec(
            num_scalar_prefetch=0,
            grid=grid,
            in_specs=[
                pl.BlockSpec((M, tk), lambda j, k: (0, k)),
                pl.BlockSpec((tk, tn), lambda j, k: (k, j)),
                pl.BlockSpec((1, tn), lambda j, k: (0, j)),
                pl.BlockSpec((1, tn), lambda j, k: (0, j)),
            ],
            out_specs=pl.BlockSpec((M, tn), lambda j, k: (0, j)),
            scratch_shapes=[pltpu.VMEM((M, tn), jnp.float32)],
        ),
        compiler_params=pltpu.CompilerParams(
            dimension_semantics=("parallel", "arbitrary"),
            vmem_limit_bytes=VMEM_LIMIT,
        ),
    )(a, w_mat,
      gamma.reshape(1, Cout).astype(jnp.float32),
      beta.reshape(1, Cout).astype(jnp.float32))
    return y.reshape(N, H, W, Cout)


# --------------------- conv layers built on the matmul ------------------------

def _col2im_s2k4p1(contrib):
    """Overlap-add for ConvTranspose2d(k=4, s=2, p=1).

    contrib: [N, H, W, 4(ky), 4(kx), Cout] f32 where contrib[iy, ix, ky, kx]
    is the term x[iy, ix] . W[:, :, ky, kx] that lands on output pixel
    (2*iy - 1 + ky, 2*ix - 1 + kx).  Pure dense shift/pad/add, no scatters."""
    N, H, W, _, _, Cout = contrib.shape
    C = contrib
    # output rows: even (py=0) <- ky=1 @ iy=a, ky=3 @ iy=a-1
    #              odd  (py=1) <- ky=2 @ iy=a, ky=0 @ iy=a+1
    r0 = C[:, :, :, 1] + jnp.pad(C[:, :-1, :, 3],
                                 ((0, 0), (1, 0), (0, 0), (0, 0), (0, 0)))
    r1 = C[:, :, :, 2] + jnp.pad(C[:, 1:, :, 0],
                                 ((0, 0), (0, 1), (0, 0), (0, 0), (0, 0)))
    rows = jnp.stack([r0, r1], axis=2).reshape(N, 2 * H, W, 4, Cout)
    # output cols: same pattern along x with the kx taps
    c0 = rows[:, :, :, 1] + jnp.pad(rows[:, :, :-1, 3],
                                    ((0, 0), (0, 0), (1, 0), (0, 0)))
    c1 = rows[:, :, :, 2] + jnp.pad(rows[:, :, 1:, 0],
                                    ((0, 0), (0, 0), (0, 1), (0, 0)))
    return jnp.stack([c0, c1], axis=3).reshape(N, 2 * H, 2 * W, Cout)


def conv_transpose2d_s2k4p1(x, w_mat, b):
    """ConvTranspose2d(Cin, Cout, 4, 2, 1) via one matmul + col2im overlap-add.
    x: [N, H, W, Cin] bf16; w_mat: [Cin, 16*Cout] bf16 (taps (ky,kx) major,
    Cout fastest); b: [Cout] f32.
    The matmul writes bf16 (halving the output stream); the overlap-add and
    bias run in f32 inside XLA."""
    N, H, W, Cin = x.shape
    Cout = w_mat.shape[1] // 16
    a = x.reshape(N * H * W, Cin)
    y = matmul_bias(a, w_mat, bias=None, out_dtype=COMPUTE_DTYPE,
                    tm_cap=256, tn_cap=_ct_tn_cap(16 * Cout), tk_cap=2048)
    contrib = y.reshape(N, H, W, 4, 4, Cout).astype(jnp.float32)
    return _col2im_s2k4p1(contrib) + b.astype(jnp.float32)


def _im2col(xp, k, Ho, Wo):
    """xp: [N, Hp, Wp, C] (already padded) -> patches [N*Ho*Wo, k*k*C]."""
    # TODO(synk): could be replaced by 9 accumulating shifted matmuls if the
    # spatial size grows; at 16x16 the patch matrix is only ~4.5 MiB.
    N, _, _, C = xp.shape
    patches = jnp.stack(
        [xp[:, dy:dy + Ho, dx:dx + Wo, :] for dy in range(k) for dx in range(k)],
        axis=3)                                   # [N, Ho, Wo, k*k, C]
    return patches.reshape(N * Ho * Wo, k * k * C)


def conv2d_3x3_p1(x, w_mat_pad, bias_pad, cout):
    """Conv2d(Cin, cout, 3, 1, 1).  Output channels are lane-padded to a
    multiple of 128 in w_mat_pad/bias_pad so stores stay lane-dense; the real
    `cout` columns are sliced out afterwards."""
    N, H, W, Cin = x.shape
    xp = jnp.pad(x, ((0, 0), (1, 1), (1, 1), (0, 0)))
    a = _im2col(xp, 3, H, W)                      # [M, 9*Cin] bf16
    y = matmul_bias(a, w_mat_pad, bias_pad, out_dtype=jnp.float32,
                    tm_cap=256, tn_cap=2048, tk_cap=a.shape[1])
    return y[:, :cout].reshape(N, H, W, cout)


# --------------------------- Decoder module -----------------------------------

def init_decoder_params(num_classes=1, dtype=jnp.float32):
    """Parameters in PyTorch layouts (weights of ConvTranspose2d are
    [Cin, Cout, kh, kw]; Conv2d are [Cout, Cin, kh, kw])."""
    key = jax.random.PRNGKey(42)
    ks = jax.random.split(key, 8)

    def init(k, shape, fan_in):
        bound = 1.0 / (fan_in ** 0.5)
        return jax.random.uniform(k, shape, dtype, -bound, bound)

    p = {}
    p["ct1_w"] = init(ks[0], (2048, 2048, 4, 4), 2048 * 16)
    p["ct1_b"] = init(ks[1], (2048,), 2048 * 16)
    p["conv1_w"] = init(ks[2], (512, 2048, 1, 1), 2048)
    p["conv1_b"] = init(ks[3], (512,), 2048)
    p["bn_gamma"] = jnp.ones((512,), dtype)
    p["bn_beta"] = jnp.zeros((512,), dtype)
    p["ct2_w"] = init(ks[4], (512, 512, 4, 4), 512 * 16)
    p["ct2_b"] = init(ks[5], (512,), 512 * 16)
    p["conv2_w"] = init(ks[6], (num_classes, 512, 3, 3), 512 * 9)
    p["conv2_b"] = init(ks[7], (num_classes,), 512 * 9)
    return p


def prepare_params(p, compute_dtype=COMPUTE_DTYPE):
    """One-time conversion of PyTorch-layout f32 params into the matmul
    layouts consumed by the kernels (bf16 weights, f32 biases/affine).
    TODO(synk): optional int8 (v5e/v6e) / fp8 (v7x) weight quantization of the
    ct weights would halve the dominant HBM stream; not enabled (accuracy)."""
    def ct_mat(w):                                    # [Cin, Cout, 4, 4]
        cin, cout = w.shape[0], w.shape[1]
        return jnp.transpose(w, (0, 2, 3, 1)).reshape(
            cin, 16 * cout).astype(compute_dtype)     # -> [Cin, (ky,kx,Cout)]

    cout2, cin2 = p["conv2_w"].shape[0], p["conv2_w"].shape[1]
    cpad = ((cout2 + 127) // 128) * 128               # lane-pad output channels
    w2 = jnp.transpose(p["conv2_w"], (2, 3, 1, 0)).reshape(9 * cin2, cout2)

    return {
        "ct1_w": ct_mat(p["ct1_w"]),
        "ct1_b": p["ct1_b"].astype(jnp.float32),
        "conv1_w": jnp.transpose(
            p["conv1_w"].reshape(p["conv1_w"].shape[0], -1),
            (1, 0)).astype(compute_dtype),            # [Cin, Cout]
        "conv1_b": p["conv1_b"].astype(jnp.float32),  # cancelled by train-BN
        "bn_gamma": p["bn_gamma"].astype(jnp.float32),
        "bn_beta": p["bn_beta"].astype(jnp.float32),
        "ct2_w": ct_mat(p["ct2_w"]),
        "ct2_b": p["ct2_b"].astype(jnp.float32),
        "conv2_w": jnp.pad(w2, ((0, 0), (0, cpad - cout2))).astype(compute_dtype),
        "conv2_b": jnp.pad(p["conv2_b"], (0, cpad - cout2)).astype(jnp.float32),
    }


@partial(jax.jit, static_argnames=("num_classes",))
def decoder_forward(x_nchw, kp, *, num_classes=1):
    # TODO(synk): BatchNorm runs in training mode (per-batch stats, no
    # running-stat updates), matching a freshly-constructed PyTorch module.
    x = jnp.transpose(x_nchw, (0, 2, 3, 1)).astype(COMPUTE_DTYPE)   # NCHW->NHWC
    x = conv_transpose2d_s2k4p1(x, kp["ct1_w"], kp["ct1_b"])        # f32
    x = conv1x1_bn_relu(x.astype(COMPUTE_DTYPE), kp["conv1_w"], kp["conv1_b"],
                        kp["bn_gamma"], kp["bn_beta"])              # bf16
    x = conv_transpose2d_s2k4p1(x, kp["ct2_w"], kp["ct2_b"])        # f32
    x = conv2d_3x3_p1(x.astype(COMPUTE_DTYPE), kp["conv2_w"], kp["conv2_b"],
                      num_classes)                                  # f32
    return jnp.transpose(x, (0, 3, 1, 2))                           # NHWC->NCHW


# --------------------------- self tests ---------------------------------------

def _ref_conv_transpose(x, w, b):
    """Pure-JAX reference for PyTorch ConvTranspose2d(k=4, s=2, p=1) in NHWC."""
    w_hwio = jnp.transpose(w[:, :, ::-1, ::-1], (2, 3, 0, 1))   # [kh,kw,Cin,Cout]
    y = jax.lax.conv_general_dilated(
        x, w_hwio, window_strides=(1, 1), padding=((2, 2), (2, 2)),
        lhs_dilation=(2, 2), dimension_numbers=("NHWC", "HWIO", "NHWC"))
    return y + b


def _self_test():
    key = jax.random.PRNGKey(1)
    ks = jax.random.split(key, 12)

    # --- conv-transpose (col2im formulation) vs lax reference ---
    x = jax.random.normal(ks[0], (2, 5, 5, 8), jnp.float32)
    w = (jax.random.normal(ks[1], (8, 16, 4, 4), jnp.float32) * 0.1).astype(
        COMPUTE_DTYPE)
    b = jax.random.normal(ks[2], (16,), jnp.float32)
    w_mat = jnp.transpose(w, (0, 2, 3, 1)).reshape(8, 16 * 16)
    got = conv_transpose2d_s2k4p1(x.astype(COMPUTE_DTYPE), w_mat, b)
    want = _ref_conv_transpose(x.astype(COMPUTE_DTYPE).astype(jnp.float32),
                               w.astype(jnp.float32), b)
    assert got.shape == want.shape == (2, 10, 10, 16), (got.shape, want.shape)
    assert float(jnp.max(jnp.abs(got - want))) < 1e-2

    # --- 3x3 conv with lane-padded Cout=1 vs lax reference ---
    xc = jax.random.normal(ks[3], (2, 6, 6, 8), jnp.float32)
    wc = (jax.random.normal(ks[4], (1, 8, 3, 3), jnp.float32) * 0.1).astype(
        COMPUTE_DTYPE)
    bc = jax.random.normal(ks[5], (1,), jnp.float32)
    wcm = jnp.pad(jnp.transpose(wc, (2, 3, 1, 0)).reshape(72, 1),
                  ((0, 0), (0, 127)))
    bcp = jnp.pad(bc, (0, 127))
    got2 = conv2d_3x3_p1(xc.astype(COMPUTE_DTYPE), wcm, bcp, 1)
    want2 = jax.lax.conv_general_dilated(
        xc.astype(COMPUTE_DTYPE).astype(jnp.float32),
        jnp.transpose(wc.astype(jnp.float32), (2, 3, 1, 0)),
        (1, 1), ((1, 1), (1, 1)),
        dimension_numbers=("NHWC", "HWIO", "NHWC")) + bc
    assert float(jnp.max(jnp.abs(got2 - want2))) < 1e-2

    # --- fused conv1x1 + BN(train) + ReLU vs jnp reference ---
    xf = jax.random.normal(ks[6], (2, 3, 3, 16), jnp.float32).astype(COMPUTE_DTYPE)
    wf = (jax.random.normal(ks[7], (16, 8), jnp.float32) * 0.2).astype(COMPUTE_DTYPE)
    bf = jax.random.normal(ks[8], (8,), jnp.float32)
    gamma = jnp.linspace(0.5, 1.5, 8, dtype=jnp.float32)
    beta = jnp.linspace(-0.2, 0.2, 8, dtype=jnp.float32)
    got3 = conv1x1_bn_relu(xf, wf, bf, gamma, beta,
                           out_dtype=jnp.float32).reshape(18, 8)
    a32 = xf.astype(jnp.float32).reshape(18, 16)
    y = a32 @ wf.astype(jnp.float32) + bf          # bias cancels under train-BN
    mu = y.mean(0, keepdims=True)
    var = ((y - mu) ** 2).mean(0, keepdims=True)
    want3 = jnp.maximum((y - mu) * jax.lax.rsqrt(var + 1e-5) * gamma + beta, 0.0)
    assert float(jnp.max(jnp.abs(got3 - want3))) < 2e-2

    # --- tiled fallback BN(train) + ReLU vs jnp reference ---
    yb = jax.random.normal(ks[9], (64, 256), jnp.float32) * 2.0 + 0.5
    gb = jnp.linspace(0.5, 1.5, 256, dtype=jnp.float32)
    bb = jnp.linspace(-0.3, 0.3, 256, dtype=jnp.float32)
    got4 = bn_relu(yb, gb, bb)
    mu4 = yb.mean(0, keepdims=True)
    var4 = ((yb - mu4) ** 2).mean(0, keepdims=True)
    want4 = jnp.maximum((yb - mu4) * jax.lax.rsqrt(var4 + 1e-5) * gb + bb, 0.0)
    assert float(jnp.max(jnp.abs(got4 - want4))) < 2e-3


if __name__ == "__main__":
    _self_test()

    params = init_decoder_params(num_classes=1)
    kparams = prepare_params(params)
    # Channel count (2048) is fixed by the module; small batch/spatial, batch=2
    # to improve arithmetic intensity of the weight-bandwidth-bound ct1.
    x = jax.random.normal(jax.random.PRNGKey(0), (2, 2048, 4, 4), jnp.float32)
    out = decoder_forward(x, kparams, num_classes=1)
    out = jax.block_until_ready(out)
    assert out.shape == (2, 1, 16, 16), out.shape
    assert bool(jnp.all(jnp.isfinite(out)))
    print("KERNEL_OK")
</pallas_src>

<mosaic_0001>
module attributes {stable_mosaic.version = 11 : i64} {
  func.func @_matmul_kernel(%arg0: i32, %arg1: i32, %arg2: i32, %arg3: memref<50x8xbf16, #tpu.memory_space<vmem>>, %arg4: memref<8x256xbf16, #tpu.memory_space<vmem>>, %arg5: memref<50x256xbf16, #tpu.memory_space<vmem>>, %arg6: memref<50x256xf32, #tpu.memory_space<vmem>>) attributes {dimension_semantics = [#tpu.dimension_semantics<parallel>, #tpu.dimension_semantics<parallel>, #tpu.dimension_semantics<arbitrary>], iteration_bounds = array<i64: 1, 1, 1>, scalar_prefetch = 0 : i64, scratch_operands = 1 : i64, tpu.core_type = #tpu.core_type<tc>, window_params = [{transform_indices = @transform_0, window_bounds = array<i64: 50, 8>}, {transform_indices = @transform_1, window_bounds = array<i64: 8, 256>}, {transform_indices = @transform_2, window_bounds = array<i64: 50, 256>}]} {
    %c0_i32 = arith.constant 0 : i32
    %0 = arith.cmpi eq, %arg2, %c0_i32 : i32
    %1 = arith.extui %0 : i1 to i32
    %c0_i32_0 = arith.constant 0 : i32
    %2 = arith.cmpi ne, %1, %c0_i32_0 : i32
    scf.if %2 {
      %cst_10 = arith.constant 0.000000e+00 : f32
      %12 = vector.broadcast %cst_10 : f32 to vector<50x256xf32>
      %c0_11 = arith.constant 0 : index
      %c0_12 = arith.constant 0 : index
      %13 = vector.load %arg6[%c0_11, %c0_12] : memref<50x256xf32, #tpu.memory_space<vmem>>, vector<50x256xf32>
      tpu.vector_store %arg6[%c0_11, %c0_12], %12 {strides = array<i32>} : memref<50x256xf32, #tpu.memory_space<vmem>>, vector<50x256xf32>,
    } else {
    }
    %c0 = arith.constant 0 : index
    %c0_1 = arith.constant 0 : index
    %3 = vector.load %arg6[%c0, %c0_1] : memref<50x256xf32, #tpu.memory_space<vmem>>, vector<50x256xf32>
    %c0_2 = arith.constant 0 : index
    %c0_3 = arith.constant 0 : index
    %4 = vector.load %arg3[%c0_2, %c0_3] : memref<50x8xbf16, #tpu.memory_space<vmem>>, vector<50x8xbf16>
    %c0_4 = arith.constant 0 : index
    %c0_5 = arith.constant 0 : index
    %5 = vector.load %arg4[%c0_4, %c0_5] : memref<8x256xbf16, #tpu.memory_space<vmem>>, vector<8x256xbf16>
    %cst = arith.constant dense<0.000000e+00> : vector<50x256xf32>
    %6 = tpu.matmul %4, %5, %cst {dimension_numbers = #tpu.dot_dimension_numbers<[1], [0], [0], [1], [0, 0, 1, 1], [], []>} : vector<50x8xbf16>, vector<8x256xbf16>, vector<50x256xf32> -> vector<50x256xf32>
    %7 = arith.addf %3, %6 : vector<50x256xf32>
    %c0_6 = arith.constant 0 : index
    %c0_7 = arith.constant 0 : index
    %8 = vector.load %arg6[%c0_6, %c0_7] : memref<50x256xf32, #tpu.memory_space<vmem>>, vector<50x256xf32>
    tpu.vector_store %arg6[%c0_6, %c0_7], %7 {strides = array<i32>} : memref<50x256xf32, #tpu.memory_space<vmem>>, vector<50x256xf32>,
    %c0_i32_8 = arith.constant 0 : i32
    %9 = arith.cmpi eq, %arg2, %c0_i32_8 : i32
    %10 = arith.extui %9 : i1 to i32
    %c0_i32_9 = arith.constant 0 : i32
    %11 = arith.cmpi ne, %10, %c0_i32_9 : i32
    scf.if %11 {
      %c0_10 = arith.constant 0 : index
      %c0_11 = arith.constant 0 : index
      %12 = vector.load %arg6[%c0_10, %c0_11] : memref<50x256xf32, #tpu.memory_space<vmem>>, vector<50x256xf32>
      %13 = arith.truncf %12 : vector<50x256xf32> to vector<50x256xbf16>
      %c0_12 = arith.constant 0 : index
      %c0_13 = arith.constant 0 : index
      %14 = vector.load %arg5[%c0_12, %c0_13] : memref<50x256xbf16, #tpu.memory_space<vmem>>, vector<50x256xbf16>
      tpu.vector_store %arg5[%c0_12, %c0_13], %13 {strides = array<i32>} : memref<50x256xbf16, #tpu.memory_space<vmem>>, vector<50x256xbf16>,
    } else {
    }
    return
  }
  func.func @transform_0(%arg0: i32, %arg1: i32, %arg2: i32) -> (i32, i32) {
    %c0_i32 = arith.constant 0 : i32
    return %arg0, %arg2 : i32, i32
  }
  func.func @transform_1(%arg0: i32, %arg1: i32, %arg2: i32) -> (i32, i32) {
    %c0_i32 = arith.constant 0 : i32
    return %arg2, %arg1 : i32, i32
  }
  func.func @transform_2(%arg0: i32, %arg1: i32, %arg2: i32) -> (i32, i32) {
    %c0_i32 = arith.constant 0 : i32
    return %arg0, %arg1 : i32, i32
  }
}

</mosaic_0001>

<llo_original>
// kernel: tpu_custom_call.1
$region0: #{tpu_custom_call.1}
  #allocation0 [shape = 'u32[]', space=smem, size = 0x4, offset = 0x4, fixed_abs, tag = 'smem constant byte address 0x4 - core index']
  #allocation1 [shape = 'u32[72,128]{1,0:T(1,128)}', space=vmem, size = 0x9000, scoped, tag = 'internal scratch']
  #allocation2 [shape = 'f32[50,256]{1,0:T(8,128)}', space=vmem, size = 0xe000, scoped, tag = 'scratch operand']
  %s0 = inlined_call_operand.vmem [shape: bf16[50,8], index: 0, kind: input, shape index: {}]
  %s1 = inlined_call_operand.vmem [shape: bf16[8,256], index: 1, kind: input, shape index: {}]
  %s2 = inlined_call_operand.hbm [shape: bf16[50,256], index: 2, kind: output, shape index: {}]
  %s3 = sld [smem:[#allocation0]]
  $region26: #{tpu_custom_call.1} parent=0
    _
  %s5 = ssub.s32 1, %s3
  %s6 = scalar_select 0, %s5, %s3
  $region1: #{tpu_custom_call.1} parent=0
    #allocation3 [shape = 'u8[28672]{0}', space=vmem, size = 0x7000, scoped, tag = 'output window, operand 0, single buffered']
    #allocation4 [shape = 's32[1]{0}', space=sflag, size = 0x4, scoped, tag = 'scoped memory for tpu_custom_call.1']
    %7 = vsyncpa [#allocation4], 0
    // Predicated region
    $region2: #{tpu_custom_call.1} parent=1 // pred_check
      _
    $region3: #{tpu_custom_call.1} parent=1 // pred_check_branch
      %9 = sbr.rel (0) target = $region5
    $region4: #{tpu_custom_call.1} parent=1 // pred_region
      _
    $region5: #{tpu_custom_call.1} parent=1 // pred_fallthru
      _
    // Predicated region
    $region6: #{tpu_custom_call.1} parent=1 // pred_check
      _
    $region7: #{tpu_custom_call.1} parent=1 // pred_check_branch
      %11 = sbr.rel (0) target = $region9
    $region8: #{tpu_custom_call.1} parent=1 // pred_region
      _
    $region9: #{tpu_custom_call.1} parent=1 // pred_fallthru
      _
    %p13 = scmp.eq.s32.totalorder 0, 0
    // Predicated region
    $region10: #{tpu_custom_call.1} parent=1 // pred_check
      %p14 = pneg %p13
    $region11: #{tpu_custom_call.1} parent=1 // pred_check_branch
      %16 = sbr.rel (%p14) target = $region13
    $region12: #{tpu_custom_call.1} parent=1 // pred_region
      %17 = vst [vmem:[#allocation2] sm:$0xff] 0.0
      %18 = vst [vmem:[#allocation2 + $0x8] sm:$0xff] 0.0
      %19 = vst [vmem:[#allocation2 + $0x10] sm:$0xff] 0.0
      %20 = vst [vmem:[#allocation2 + $0x18] sm:$0xff] 0.0
      %21 = vst [vmem:[#allocation2 + $0x20] sm:$0xff] 0.0
      %22 = vst [vmem:[#allocation2 + $0x28] sm:$0xff] 0.0
      %23 = vst [vmem:[#allocation2 + $0x30] sm:$0xff] 0.0
      %24 = vst [vmem:[#allocation2 + $0x38] sm:$0xff] 0.0
      %25 = vst [vmem:[#allocation2 + $0x40] sm:$0xff] 0.0
      %26 = vst [vmem:[#allocation2 + $0x48] sm:$0xff] 0.0
      %27 = vst [vmem:[#allocation2 + $0x50] sm:$0xff] 0.0
      %28 = vst [vmem:[#allocation2 + $0x58] sm:$0xff] 0.0
      %29 = vst [vmem:[#allocation2 + $0x60] sm:$0x3] 0.0
      %30 = vst [vmem:[#allocation2 + $0x68] sm:$0x3] 0.0
    $region13: #{tpu_custom_call.1} parent=1 // pred_fallthru
      _
    %v31 = vld [vmem:[#allocation2] sm:$0xff]
    %v32 = vld [vmem:[#allocation2 + $0x8] sm:$0xff]
    %v33 = vld [vmem:[#allocation2 + $0x10] sm:$0xff]
    %v34 = vld [vmem:[#allocation2 + $0x18] sm:$0xff]
    %v35 = vld [vmem:[#allocation2 + $0x20] sm:$0xff]
    %v36 = vld [vmem:[#allocation2 + $0x28] sm:$0xff]
    %v37 = vld [vmem:[#allocation2 + $0x30] sm:$0xff]
    %v38 = vld [vmem:[#allocation2 + $0x38] sm:$0xff]
    %v39 = vld [vmem:[#allocation2 + $0x40] sm:$0xff]
    %v40 = vld [vmem:[#allocation2 + $0x48] sm:$0xff]
    %v41 = vld [vmem:[#allocation2 + $0x50] sm:$0xff]
    %v42 = vld [vmem:[#allocation2 + $0x58] sm:$0xff]
    %v43 = vld [vmem:[#allocation2 + $0x60] sm:$0x3]
    %v44 = vld [vmem:[#allocation2 + $0x68] sm:$0x3]
    %v45 = vld [vmem:[%s0] sm:$0xf]
    %v46 = vld [vmem:[%s0 + $0x4] sm:$0xf]
    %v47 = vld [vmem:[%s0 + $0x8] sm:$0xf]
    %v48 = vld [vmem:[%s0 + $0xc] sm:$0xf]
    %v49 = vld [vmem:[%s0 + $0x10] sm:$0xf]
    %v50 = vld [vmem:[%s0 + $0x14] sm:$0xf]
    %v51 = vld [vmem:[%s0 + $0x18] sm:$0x1]
    %v52 = vld [vmem:[%s1] sm:$0xff]
    %v60 = vunpack.c.l.b16 %v45
    %v61 = vunpack.c.l.b16 %v46
    %v62 = vunpack.c.l.b16 %v47
    %v63 = vunpack.c.l.b16 %v48
    %v64 = vunpack.c.l.b16 %v49
    %v65 = vunpack.c.l.b16 %v50
    %v66 = vunpack.c.l.b16 %v51
    %v67 = vpack.c.b16 %v61, %v60
    %v68 = vpack.c.b16 %v63, %v62
    %v69 = vpack.c.b16 %v65, %v64
    %v70 = vpack.c.b16 %v66, %v66
    %v72 = vunpack.c.l.b16 %v52
    %v73 = vunpack.c.h.b16 %v52
    %v74 = vpack.c.b16 %v72, %v72
    %v75 = vpack.c.b16 %v73, %v73
    %vm76 = vcmask 64512
    %v78 = vsel %vm76, %v67, 0
    %v81 = vsel %vm76, %v68, 0
    %v84 = vsel %vm76, %v69, 0
    %v87 = vsel %vm76, %v70, 0
    %vm89 = vcmask 1043456
    %v91 = vsel %vm89, %v74, 0
    %v94 = vsel %vm89, %v75, 0
    %96 = vmatpush.bf16.msra.mxu0 0
    %97 = vmatpush.bf16.msra.mxu0 0
    %98 = vmatpush.bf16.msra.mxu0 0
    %99 = vmatpush.bf16.msra.mxu0 0
    %100 = vmatpush.bf16.msra.mxu0 0
    %101 = vmatpush.bf16.msra.mxu0 0
    %102 = vmatpush.bf16.msra.mxu0 0
    %103 = vmatpush.bf16.msra.mxu0 %v91
    %104 = vmatmul.bf16.gmra.mxu0 %v78
    %v105 = vpop.f32.mrf.mxu0
    %v106 = vadd.f32 0.0, %v105
    %v107 = vpop.f32.mrf.mxu0
    %v108 = vadd.f32 0.0, %v107
    %109 = vmatmul.bf16.gmra.mxu0 %v81
    %v110 = vpop.f32.mrf.mxu0
    %v111 = vadd.f32 0.0, %v110
    %v112 = vpop.f32.mrf.mxu0
    %v113 = vadd.f32 0.0, %v112
    %114 = vmatmul.bf16.gmra.mxu0 %v84
    %v115 = vpop.f32.mrf.mxu0
    %v116 = vadd.f32 0.0, %v115
    %v117 = vpop.f32.mrf.mxu0
    %v118 = vadd.f32 0.0, %v117
    %119 = vmatmul.bf16.gmra.mxu0 %v87
    %v120 = vpop.f32.mrf.mxu0
    %v121 = vadd.f32 0.0, %v120
    %v122 = vpop.f32.mrf.mxu0
    %123 = vdwg.mxu0
    %124 = vmatpush.bf16.msra.mxu0 0
    %125 = vmatpush.bf16.msra.mxu0 0
    %126 = vmatpush.bf16.msra.mxu0 0
    %127 = vmatpush.bf16.msra.mxu0 0
    %128 = vmatpush.bf16.msra.mxu0 0
    %129 = vmatpush.bf16.msra.mxu0 0
    %130 = vmatpush.bf16.msra.mxu0 0
    %131 = vmatpush.bf16.msra.mxu0 %v94
    %132 = vmatmul.bf16.gmra.mxu0 %v78
    %v133 = vpop.f32.mrf.mxu0
    %v134 = vadd.f32 0.0, %v133
    %v135 = vpop.f32.mrf.mxu0
    %v136 = vadd.f32 0.0, %v135
    %137 = vmatmul.bf16.gmra.mxu0 %v81
    %v138 = vpop.f32.mrf.mxu0
    %v139 = vadd.f32 0.0, %v138
    %v140 = vpop.f32.mrf.mxu0
    %v141 = vadd.f32 0.0, %v140
    %142 = vmatmul.bf16.gmra.mxu0 %v84
    %v143 = vpop.f32.mrf.mxu0
    %v144 = vadd.f32 0.0, %v143
    %v145 = vpop.f32.mrf.mxu0
    %v146 = vadd.f32 0.0, %v145
    %147 = vmatmul.bf16.gmra.mxu0 %v87
    %v148 = vpop.f32.mrf.mxu0
    %v149 = vadd.f32 0.0, %v148
    %v150 = vpop.f32.mrf.mxu0
    %151 = vdwg.mxu0
    %v152 = vadd.f32 %v31, %v106
    %v153 = vadd.f32 %v32, %v134
    %v154 = vadd.f32 %v33, %v108
    %v155 = vadd.f32 %v34, %v136
    %v156 = vadd.f32 %v35, %v111
    %v157 = vadd.f32 %v36, %v139
    %v158 = vadd.f32 %v37, %v113
    %v159 = vadd.f32 %v38, %v141
    %v160 = vadd.f32 %v39, %v116
    %v161 = vadd.f32 %v40, %v144
    %v162 = vadd.f32 %v41, %v118
    %v163 = vadd.f32 %v42, %v146
    %v164 = vadd.f32 %v43, %v121
    %v165 = vadd.f32 %v44, %v149
    %166 = vst [vmem:[#allocation2] sm:$0xff] %v152
    %167 = vst [vmem:[#allocation2 + $0x8] sm:$0xff] %v153
    %168 = vst [vmem:[#allocation2 + $0x10] sm:$0xff] %v154
    %169 = vst [vmem:[#allocation2 + $0x18] sm:$0xff] %v155
    %170 = vst [vmem:[#allocation2 + $0x20] sm:$0xff] %v156
    %171 = vst [vmem:[#allocation2 + $0x28] sm:$0xff] %v157
    %172 = vst [vmem:[#allocation2 + $0x30] sm:$0xff] %v158
    %173 = vst [vmem:[#allocation2 + $0x38] sm:$0xff] %v159
    %174 = vst [vmem:[#allocation2 + $0x40] sm:$0xff] %v160
    %175 = vst [vmem:[#allocation2 + $0x48] sm:$0xff] %v161
    %176 = vst [vmem:[#allocation2 + $0x50] sm:$0xff] %v162
    %177 = vst [vmem:[#allocation2 + $0x58] sm:$0xff] %v163
    %178 = vst [vmem:[#allocation2 + $0x60] sm:$0x3] %v164
    %179 = vst [vmem:[#allocation2 + $0x68] sm:$0x3] %v165
    // Predicated region
    $region14: #{tpu_custom_call.1} parent=1 // pred_check
      %p180 = pneg %p13
    $region15: #{tpu_custom_call.1} parent=1 // pred_check_branch
      %182 = sbr.rel (%p180) target = $region17
    $region16: #{tpu_custom_call.1} parent=1 // pred_region
      %v183 = vld [vmem:[#allocation2] sm:$0xff]
      %v184 = vld [vmem:[#allocation2 + $0x8] sm:$0xff]
      %v185 = vld [vmem:[#allocation2 + $0x10] sm:$0xff]
      %v186 = vld [vmem:[#allocation2 + $0x18] sm:$0xff]
      %v187 = vld [vmem:[#allocation2 + $0x20] sm:$0xff]
      %v188 = vld [vmem:[#allocation2 + $0x28] sm:$0xff]
      %v189 = vld [vmem:[#allocation2 + $0x30] sm:$0xff]
      %v190 = vld [vmem:[#allocation2 + $0x38] sm:$0xff]
      %v191 = vld [vmem:[#allocation2 + $0x40] sm:$0xff]
      %v192 = vld [vmem:[#allocation2 + $0x48] sm:$0xff]
      %v193 = vld [vmem:[#allocation2 + $0x50] sm:$0xff]
      %v194 = vld [vmem:[#allocation2 + $0x58] sm:$0xff]
      %v195 = vld [vmem:[#allocation2 + $0x60] sm:$0x3]
      %v196 = vld [vmem:[#allocation2 + $0x68] sm:$0x3]
      %v197 = vpack.c.bf16 %v184, %v183
      %v198 = vpack.c.bf16 %v186, %v185
      %v199 = vpack.c.bf16 %v188, %v187
      %v200 = vpack.c.bf16 %v190, %v189
      %v201 = vpack.c.bf16 %v192, %v191
      %v202 = vpack.c.bf16 %v194, %v193
      %v203 = vpack.c.bf16 %v196, %v195
      %204 = vst [vmem:[#allocation3] sm:$0xff] %v197
      %205 = vst [vmem:[#allocation3 + $0x8] sm:$0xff] %v198
      %206 = vst [vmem:[#allocation3 + $0x10] sm:$0xff] %v199
      %207 = vst [vmem:[#allocation3 + $0x18] sm:$0xff] %v200
      %208 = vst [vmem:[#allocation3 + $0x20] sm:$0xff] %v201
      %209 = vst [vmem:[#allocation3 + $0x28] sm:$0xff] %v202
      %210 = vst [vmem:[#allocation3 + $0x30] sm:$0x11] %v203
    $region17: #{tpu_custom_call.1} parent=1 // pred_fallthru
      _
    // Predicated region
    $region18: #{tpu_custom_call.1} parent=1 // pred_check
      _
    $region19: #{tpu_custom_call.1} parent=1 // pred_check_branch
      %212 = sbr.rel (0) target = $region21
    $region20: #{tpu_custom_call.1} parent=1 // pred_region
      %214 = vsyncadd [#allocation4], 0
      %s215 = sshll.u32 [#allocation3], 4
      %s216 = int_to_ptr.vmem [resolvable:$true] %s215
      %s217 = sshll.u32 %s2, 4
      %s218 = int_to_ptr.hbm [resolvable:$true] %s217
      %223 = dma.vmem_to_hbm [thread:$0]  %s216, 896, %s218, [#allocation4], 128, 128, 8
    $region21: #{tpu_custom_call.1} parent=1 // pred_fallthru
      _
    // Predicated region
    $region22: #{tpu_custom_call.1} parent=1 // pred_check
      _
    $region23: #{tpu_custom_call.1} parent=1 // pred_check_branch
      %225 = sbr.rel (0) target = $region25
    $region24: #{tpu_custom_call.1} parent=1 // pred_region
      %227 = dma.done [#allocation4], 896
    $region25: #{tpu_custom_call.1} parent=1 // pred_fallthru
      _
    %228 = vsyncpa [#allocation4], 1

</llo_original>
